<compile_context>
chip_gen: v6e
topology: v6e:2x2x1
jax: 0.10.0
libtpu: 0.0.40
codegen_flags: <defaults>
</compile_context>

<pallas_src>
import jax
import jax.numpy as jnp
from jax import lax
from jax.experimental import pallas as pl
from jax.experimental.pallas import tpu as pltpu


def _attention_kernel(x_ref, w_ref, b_ref, ctx_ref, attn_ref):
    # x_ref:    (Bblk, T, H) VMEM slab of lstm_output
    # w_ref:    (H, 1)       projection weight column (MXU RHS)
    # b_ref:    (1,)         projection bias in SMEM
    # ctx_ref:  (Bblk, H)    output context block
    # attn_ref: (Bblk, T)    output attention-weight block
    bblk, t, h = x_ref.shape
    x = x_ref[...].astype(jnp.float32)               # (Bblk, T, H)
    w = w_ref[...].astype(jnp.float32)               # (H, 1)
    b = b_ref[0]                                     # scalar from SMEM

    # scores on the MXU (idle otherwise): (Bblk*T, H) @ (H, 1) -> (Bblk, T, 1).
    # Keeping the trailing singleton keeps T on the sublane axis, so no hidden
    # XLU relayout between the softmax and the p*x product below.
    x2d = x.reshape(bblk * t, h)
    scores = lax.dot_general(
        x2d, w, (((1,), (0,)), ((), ())),
        preferred_element_type=jnp.float32,
    ).reshape(bblk, t, 1) + b                        # (Bblk, T, 1)

    # Numerically-stable softmax over T (axis=1), per batch row.
    m = jnp.max(scores, axis=1, keepdims=True)       # (Bblk, 1, 1)
    e = jnp.exp(scores - m)                          # (Bblk, T, 1)
    denom = jnp.sum(e, axis=1, keepdims=True)        # (Bblk, 1, 1)
    # Exact reciprocal keeps the 1e-5 validation tolerance; the kernel is
    # HBM-bound so this costs nothing (switch to approx=True for the EUP slot
    # if looser tolerances are acceptable).
    p = e * pl.reciprocal(denom, approx=False)       # (Bblk, T, 1)

    # context = sum_T p * x -> (Bblk, H).  Lane-broadcast of p plus a
    # sublane-axis reduce: mostly plain VPU adds across T/8 vregs.
    ctx = jnp.sum(p * x, axis=1)                     # (Bblk, H)
    ctx_ref[...] = ctx.astype(ctx_ref.dtype)

    # Single small relayout at the attn store: (Bblk, T, 1) -> (Bblk, T).
    attn_ref[...] = p.reshape(bblk, t).astype(attn_ref.dtype)


def _vmem_capacity_bytes():
    try:
        return int(pltpu.get_tpu_info().vmem_capacity_bytes)
    except Exception:
        return 128 << 20  # conservative default (v5e/v6e class)


def _choose_block_b(B, T, H, itemsize, vmem_cap_bytes):
    """Pick how many batch rows to process per grid step.

    Targets a generation-appropriate tile size, keeps >= 4 grid steps when B
    allows (megacore sharding + pipelining), and strongly prefers a block size
    that divides B (so no HBM pad/copy of lstm_output is needed).
    """
    # v7x-class TCs only have 64 MiB of VMEM -> smaller tiles; v5e/v6e: 128 MiB.
    target = (2 << 20) if vmem_cap_bytes <= (64 << 20) else (8 << 20)
    per_row = max(1, T * H * itemsize)
    cand = max(1, target // per_row)
    if B >= 32:
        # Leave at least ~4 grid steps so the "parallel" axis spans both v7x
        # TensorCores and the pipeline always has a next tile to prefetch.
        cand = min(cand, -(-B // 4))
    if cand >= B:
        return B                                  # single full block, no pad
    # Largest multiple-of-8 divisor of B that fits the target -> no padding.
    cand8 = max(8, (cand // 8) * 8)
    for bb in range(min(cand8, (B // 8) * 8), 0, -8):
        if B % bb == 0:
            return bb
    # Rare fallback (large B that is not a multiple of 8): wrapper will pad.
    # TODO(synk): masked ragged tail (or a tiny second pallas_call) instead of
    # padding; and a T-chunked online-softmax path for huge T*H on v7x.
    return cand8


def attention_forward(lstm_output, weight, bias, *, block_b=None,
                      vmem_limit_bytes=None):
    """Pallas implementation of Attention.forward.

    Args:
      lstm_output: (B, T, H)
      weight:      (1, H)   (nn.Linear(hidden_dim, 1).weight)
      bias:        (1,)     (nn.Linear(hidden_dim, 1).bias)

    Returns:
      context:      (B, H)
      attn_weights: (B, T)
    """
    B, T, H = lstm_output.shape
    itemsize = jnp.dtype(lstm_output.dtype).itemsize
    vmem_cap = _vmem_capacity_bytes()

    if vmem_limit_bytes is None:
        # Never request (nearly) all of physical VMEM on v7x-class parts.
        vmem_limit_bytes = (40 << 20) if vmem_cap <= (64 << 20) else (64 << 20)
    if block_b is None:
        block_b = _choose_block_b(B, T, H, itemsize, vmem_cap)
    bblk = int(block_b)

    x = lstm_output
    b_pad = B
    if B % bblk != 0:
        # Rare fallback only (block chooser prefers divisors of B): padded rows
        # are zeros -> finite uniform softmax, sliced off afterwards.
        b_pad = pl.cdiv(B, bblk) * bblk
        x = jnp.pad(x, ((0, b_pad - B), (0, 0), (0, 0)))

    w_col = weight.reshape(H, 1)   # MXU RHS: K on sublanes, N=1
    b_vec = bias.reshape(1)

    grid = (b_pad // bblk,)
    grid_spec = pltpu.PrefetchScalarGridSpec(
        num_scalar_prefetch=0,
        grid=grid,
        in_specs=[
            pl.BlockSpec((bblk, T, H), lambda i: (i, 0, 0)),    # batch slab
            pl.BlockSpec((H, 1), lambda i: (0, 0)),             # shared weight
            pl.BlockSpec(memory_space=pltpu.MemorySpace.SMEM),  # bias (scalar)
        ],
        out_specs=[
            pl.BlockSpec((bblk, H), lambda i: (i, 0)),          # context
            pl.BlockSpec((bblk, T), lambda i: (i, 0)),          # attn weights
        ],
    )

    context, attn = pl.pallas_call(
        _attention_kernel,
        out_shape=(
            jax.ShapeDtypeStruct((b_pad, H), lstm_output.dtype),
            jax.ShapeDtypeStruct((b_pad, T), lstm_output.dtype),
        ),
        grid_spec=grid_spec,
        compiler_params=pltpu.CompilerParams(
            dimension_semantics=("parallel",),   # shard batch blocks across TCs
            vmem_limit_bytes=int(vmem_limit_bytes),
        ),
    )(x, w_col, b_vec)

    if b_pad != B:
        context = context[:B]
        attn = attn[:B]
    return context, attn


def _reference(lstm_output, weight, bias):
    # Pure-JAX reference mirroring the PyTorch module.
    scores = jnp.einsum("bth,oh->bto", lstm_output, weight)[..., 0] + bias[0]
    attn = jax.nn.softmax(scores, axis=1)
    context = jnp.einsum("bt,bth->bh", attn, lstm_output)
    return context, attn


if __name__ == "__main__":
    key = jax.random.PRNGKey(0)
    kx, kw, kb, kx2 = jax.random.split(key, 4)

    # Small shapes implied by the module: batch=2, seq=8, hidden=32.
    B, T, H = 2, 8, 32
    lstm_output = jax.random.normal(kx, (B, T, H), dtype=jnp.float32)
    weight = jax.random.normal(kw, (1, H), dtype=jnp.float32) * (1.0 / jnp.sqrt(H))
    bias = jax.random.normal(kb, (1,), dtype=jnp.float32) * 0.1

    context, attn = attention_forward(lstm_output, weight, bias)
    context = jax.block_until_ready(context)
    attn = jax.block_until_ready(attn)

    ref_ctx, ref_attn = _reference(lstm_output, weight, bias)
    assert jnp.allclose(context, ref_ctx, atol=1e-5, rtol=1e-5), "context mismatch"
    assert jnp.allclose(attn, ref_attn, atol=1e-5, rtol=1e-5), "attn mismatch"

    # Second check exercising a multi-step grid (block_b=8 -> grid=(2,)).
    B2 = 16
    x2 = jax.random.normal(kx2, (B2, T, H), dtype=jnp.float32)
    ctx2, attn2 = attention_forward(x2, weight, bias, block_b=8)
    ctx2 = jax.block_until_ready(ctx2)
    attn2 = jax.block_until_ready(attn2)
    ref_ctx2, ref_attn2 = _reference(x2, weight, bias)
    assert jnp.allclose(ctx2, ref_ctx2, atol=1e-5, rtol=1e-5), "context mismatch (grid)"
    assert jnp.allclose(attn2, ref_attn2, atol=1e-5, rtol=1e-5), "attn mismatch (grid)"

    print("KERNEL_OK")
</pallas_src>

<mosaic_0001>
module attributes {stable_mosaic.version = 11 : i64} {
  func.func @_attention_kernel(%arg0: i32, %arg1: memref<2x8x32xf32, #tpu.memory_space<vmem>>, %arg2: memref<32x1xf32, #tpu.memory_space<vmem>>, %arg3: memref<1xf32, #tpu.memory_space<smem>>, %arg4: memref<2x32xf32, #tpu.memory_space<vmem>>, %arg5: memref<2x8xf32, #tpu.memory_space<vmem>>) attributes {dimension_semantics = [#tpu.dimension_semantics<parallel>], iteration_bounds = array<i64: 1>, scalar_prefetch = 0 : i64, scratch_operands = 0 : i64, tpu.core_type = #tpu.core_type<tc>, window_params = [{transform_indices = @transform_0, window_bounds = array<i64: 2, 8, 32>}, {pipeline_mode = #tpu.pipeline_mode<synchronous>, transform_indices = @transform_1, window_bounds = array<i64: 32, 1>}, {transform_indices = @transform_2, window_bounds = array<i64: 1>}, {transform_indices = @transform_3, window_bounds = array<i64: 2, 32>}, {transform_indices = @transform_4, window_bounds = array<i64: 2, 8>}]} {
    %c0 = arith.constant 0 : index
    %c0_0 = arith.constant 0 : index
    %c0_1 = arith.constant 0 : index
    %0 = vector.load %arg1[%c0, %c0_0, %c0_1] : memref<2x8x32xf32, #tpu.memory_space<vmem>>, vector<2x8x32xf32>
    %c0_2 = arith.constant 0 : index
    %c0_3 = arith.constant 0 : index
    %1 = vector.load %arg2[%c0_2, %c0_3] : memref<32x1xf32, #tpu.memory_space<vmem>>, vector<32x1xf32>
    %c0_4 = arith.constant 0 : index
    %2 = memref.load %arg3[%c0_4] : memref<1xf32, #tpu.memory_space<smem>>
    %3 = vector.shape_cast %0 : vector<2x8x32xf32> to vector<16x32xf32>
    %cst = arith.constant dense<0.000000e+00> : vector<16x1xf32>
    %4 = tpu.matmul %3, %1, %cst {dimension_numbers = #tpu.dot_dimension_numbers<[1], [0], [0], [1], [0, 0, 1, 1], [], []>} : vector<16x32xf32>, vector<32x1xf32>, vector<16x1xf32> -> vector<16x1xf32>
    %5 = vector.shape_cast %4 : vector<16x1xf32> to vector<2x8x1xf32>
    %6 = vector.broadcast %2 : f32 to vector<2x8x1xf32>
    %7 = arith.addf %5, %6 : vector<2x8x1xf32>
    %cst_5 = arith.constant dense<0xFF800000> : vector<2x1xf32>
    %8 = vector.multi_reduction <maximumf>, %7, %cst_5 [1] : vector<2x8x1xf32> to vector<2x1xf32>
    %9 = vector.shape_cast %8 : vector<2x1xf32> to vector<2x1x1xf32>
    %10 = vector.broadcast %9 : vector<2x1x1xf32> to vector<2x8x1xf32>
    %11 = arith.subf %7, %10 : vector<2x8x1xf32>
    %12 = math.exp %11 : vector<2x8x1xf32>
    %cst_6 = arith.constant dense<0.000000e+00> : vector<2x1xf32>
    %13 = vector.multi_reduction <add>, %12, %cst_6 [1] : vector<2x8x1xf32> to vector<2x1xf32>
    %14 = vector.shape_cast %13 : vector<2x1xf32> to vector<2x1x1xf32>
    %15 = tpu.reciprocal %14 : vector<2x1x1xf32> -> vector<2x1x1xf32>
    %16 = vector.broadcast %15 : vector<2x1x1xf32> to vector<2x8x1xf32>
    %17 = arith.mulf %12, %16 : vector<2x8x1xf32>
    %18 = vector.broadcast %17 : vector<2x8x1xf32> to vector<2x8x32xf32>
    %19 = arith.mulf %18, %0 : vector<2x8x32xf32>
    %cst_7 = arith.constant dense<0.000000e+00> : vector<2x32xf32>
    %20 = vector.multi_reduction <add>, %19, %cst_7 [1] : vector<2x8x32xf32> to vector<2x32xf32>
    %c0_8 = arith.constant 0 : index
    %c0_9 = arith.constant 0 : index
    %21 = vector.load %arg4[%c0_8, %c0_9] : memref<2x32xf32, #tpu.memory_space<vmem>>, vector<2x32xf32>
    tpu.vector_store %arg4[%c0_8, %c0_9], %20 {strides = array<i32>} : memref<2x32xf32, #tpu.memory_space<vmem>>, vector<2x32xf32>,
    %22 = vector.shape_cast %17 : vector<2x8x1xf32> to vector<2x8xf32>
    %c0_10 = arith.constant 0 : index
    %c0_11 = arith.constant 0 : index
    %23 = vector.load %arg5[%c0_10, %c0_11] : memref<2x8xf32, #tpu.memory_space<vmem>>, vector<2x8xf32>
    tpu.vector_store %arg5[%c0_10, %c0_11], %22 {strides = array<i32>} : memref<2x8xf32, #tpu.memory_space<vmem>>, vector<2x8xf32>,
    return
  }
  func.func @transform_0(%arg0: i32) -> (i32, i32, i32) {
    %c0_i32 = arith.constant 0 : i32
    %c0_i32_0 = arith.constant 0 : i32
    %c0_i32_1 = arith.constant 0 : i32
    return %arg0, %c0_i32, %c0_i32_0 : i32, i32, i32
  }
  func.func @transform_1(%arg0: i32) -> (i32, i32) {
    %c0_i32 = arith.constant 0 : i32
    %c0_i32_0 = arith.constant 0 : i32
    %c0_i32_1 = arith.constant 0 : i32
    return %c0_i32, %c0_i32_0 : i32, i32
  }
  func.func @transform_2(%arg0: i32) -> i32 {
    %c0_i32 = arith.constant 0 : i32
    %c0_i32_0 = arith.constant 0 : i32
    return %c0_i32 : i32
  }
  func.func @transform_3(%arg0: i32) -> (i32, i32) {
    %c0_i32 = arith.constant 0 : i32
    %c0_i32_0 = arith.constant 0 : i32
    return %arg0, %c0_i32 : i32, i32
  }
  func.func @transform_4(%arg0: i32) -> (i32, i32) {
    %c0_i32 = arith.constant 0 : i32
    %c0_i32_0 = arith.constant 0 : i32
    return %arg0, %c0_i32 : i32, i32
  }
}

</mosaic_0001>

<llo_original>
// kernel: tpu_custom_call.1
$region0: #{tpu_custom_call.1}
  #allocation0 [shape = 'u32[]', space=smem, size = 0x4, offset = 0x4, fixed_abs, tag = 'smem constant byte address 0x4 - core index']
  #allocation1 [shape = 'u32[144,128]{1,0:T(1,128)}', space=vmem, size = 0x12000, scoped, tag = 'internal scratch']
  #allocation2 [shape = 'f32[1]{0:T(128)S(6)}', space=smem, size = 0x200, scoped, tag = 'scoped memory for tpu_custom_call.1']
  %s0 = inlined_call_operand.vmem [shape: f32[2,8,32], index: 0, kind: input, shape index: {}]
  %s1 = inlined_call_operand.vmem [shape: f32[32,1], index: 1, kind: input, shape index: {}]
  %s2 = inlined_call_operand.<no memory space> [shape: f32[1], index: 2, kind: input, shape index: {}]
  %s3 = inlined_call_operand.hbm [shape: f32[2,32], index: 3, kind: output, shape index: {0}]
  %s4 = inlined_call_operand.hbm [shape: f32[2,8], index: 4, kind: output, shape index: {1}]
  %5 = xla_tuple %s3, %s4
  %s6 = sld [smem:[#allocation0]]
  $region30: #{tpu_custom_call.1} parent=0
    _
  %s8 = ssub.s32 1, %s6
  %s9 = scalar_select 0, %s8, %s6
  %10 = sst [smem:[#allocation2]] %s2
  $region1: #{tpu_custom_call.1} parent=0
    #allocation3 [shape = 'u8[1024]{0}', space=vmem, size = 0x400, scoped, tag = 'output window, operand 0, single buffered']
    #allocation4 [shape = 's32[1]{0}', space=sflag, size = 0x4, scoped, tag = 'scoped memory for tpu_custom_call.1']
    #allocation5 [shape = 'u8[1024]{0}', space=vmem, size = 0x400, scoped, tag = 'output window, operand 1, single buffered']
    #allocation6 [shape = 's32[1]{0}', space=sflag, size = 0x4, scoped, tag = 'scoped memory for tpu_custom_call.1']
    %11 = vsyncpa [#allocation4], 0
    %12 = vsyncpa [#allocation6], 0
    // Predicated region
    $region2: #{tpu_custom_call.1} parent=1 // pred_check
      _
    $region3: #{tpu_custom_call.1} parent=1 // pred_check_branch
      %14 = sbr.rel (0) target = $region5
    $region4: #{tpu_custom_call.1} parent=1 // pred_region
      _
    $region5: #{tpu_custom_call.1} parent=1 // pred_fallthru
      _
    // Predicated region
    $region6: #{tpu_custom_call.1} parent=1 // pred_check
      _
    $region7: #{tpu_custom_call.1} parent=1 // pred_check_branch
      %16 = sbr.rel (0) target = $region9
    $region8: #{tpu_custom_call.1} parent=1 // pred_region
      _
    $region9: #{tpu_custom_call.1} parent=1 // pred_fallthru
      _
    // Predicated region
    $region10: #{tpu_custom_call.1} parent=1 // pred_check
      _
    $region11: #{tpu_custom_call.1} parent=1 // pred_check_branch
      %18 = sbr.rel (0) target = $region13
    $region12: #{tpu_custom_call.1} parent=1 // pred_region
      _
    $region13: #{tpu_custom_call.1} parent=1 // pred_fallthru
      _
    %v19 = vld [vmem:[%s0] sm:$0xff]
    %v20 = vld [vmem:[%s0 + $0x8] sm:$0xff]
    %v21 = vld [vmem:[%s1] sm:$0xff]
    %v22 = vld [vmem:[%s1 + $0x8] sm:$0xff]
    %v23 = vld [vmem:[%s1 + $0x10] sm:$0xff]
    %v24 = vld [vmem:[%s1 + $0x18] sm:$0xff]
    %s25 = sld [smem:[#allocation2]]
    %vm26 = vcmask 261120
    %v28 = vsel %vm26, %v19, 0
    %v31 = vsel %vm26, %v20, 0
    %33 = vmatprep.subr.mxu0 0.0
    %34 = vmatpush1.msra.mxu0 0.0
    %35 = vmatprep.subr.mxu0 0.0
    %36 = vmatpush1.msra.mxu0 0.0
    %37 = vmatprep.subr.mxu0 0.0
    %38 = vmatpush1.msra.mxu0 0.0
    %39 = vmatprep.subr.mxu0 0.0
    %40 = vmatpush1.msra.mxu0 0.0
    %41 = vmatprep.subr.mxu0 0.0
    %42 = vmatpush1.msra.mxu0 0.0
    %43 = vmatprep.subr.mxu0 0.0
    %44 = vmatpush1.msra.mxu0 0.0
    %45 = vmatprep.subr.mxu0 0.0
    %46 = vmatpush1.msra.mxu0 0.0
    %47 = vmatprep.subr.mxu0 0.0
    %48 = vmatpush1.msra.mxu0 0.0
    %49 = vmatprep.subr.mxu0 0.0
    %50 = vmatpush1.msra.mxu0 0.0
    %51 = vmatprep.subr.mxu0 0.0
    %52 = vmatpush1.msra.mxu0 0.0
    %53 = vmatprep.subr.mxu0 0.0
    %54 = vmatpush1.msra.mxu0 0.0
    %55 = vmatprep.subr.mxu0 0.0
    %56 = vmatpush1.msra.mxu0 0.0
    %57 = vmatprep.subr.mxu0 0.0
    %58 = vmatpush1.msra.mxu0 %v24
    %59 = vmatprep.subr.mxu0 0.0
    %60 = vmatpush1.msra.mxu0 %v23
    %61 = vmatprep.subr.mxu0 0.0
    %62 = vmatpush1.msra.mxu0 %v22
    %63 = vmatprep.subr.mxu0 0.0
    %64 = vmatpush1.msra.mxu0 %v21
    %65 = vmatprep.subr.mxu0 0.0
    %66 = vmatpush2.msra.mxu0 0.0
    %67 = vmatprep.subr.mxu0 0.0
    %68 = vmatpush2.msra.mxu0 0.0
    %69 = vmatprep.subr.mxu0 0.0
    %70 = vmatpush2.msra.mxu0 0.0
    %71 = vmatprep.subr.mxu0 0.0
    %72 = vmatpush2.msra.mxu0 0.0
    %73 = vmatprep.subr.mxu0 0.0
    %74 = vmatpush2.msra.mxu0 0.0
    %75 = vmatprep.subr.mxu0 0.0
    %76 = vmatpush2.msra.mxu0 0.0
    %77 = vmatprep.subr.mxu0 0.0
    %78 = vmatpush2.msra.mxu0 0.0
    %79 = vmatprep.subr.mxu0 0.0
    %80 = vmatpush2.msra.mxu0 0.0
    %81 = vmatprep.subr.mxu0 0.0
    %82 = vmatpush2.msra.mxu0 0.0
    %83 = vmatprep.subr.mxu0 0.0
    %84 = vmatpush2.msra.mxu0 0.0
    %85 = vmatprep.subr.mxu0 0.0
    %86 = vmatpush2.msra.mxu0 0.0
    %87 = vmatprep.subr.mxu0 0.0
    %88 = vmatpush2.msra.mxu0 0.0
    %89 = vmatprep.subr.mxu0 0.0
    %90 = vmatpush2.msra.mxu0 0.0
    %91 = vmatprep.subr.mxu0 0.0
    %92 = vmatpush2.msra.mxu0 0.0
    %93 = vmatprep.subr.mxu0 0.0
    %94 = vmatpush2.msra.mxu0 0.0
    %95 = vmatprep.subr.mxu0 0.0
    %96 = vmatpush2.msra.mxu0 0.0
    %97 = vmatprep.mubr.f32.mxu0 0.0
    %98 = vmatmul.mubr.f32.gmra.mxu0 %v28
    %v99 = vpop.f32.mrf.mxu0
    %v100 = vadd.f32 0.0, %v99
    %v101 = vpop.f32.mrf.mxu0
    %102 = vmatprep.mubr.f32.mxu0 0.0
    %103 = vmatmul.mubr.f32.gmra.mxu0 %v31
    %v104 = vpop.f32.mrf.mxu0
    %v105 = vadd.f32 0.0, %v104
    %v106 = vpop.f32.mrf.mxu0
    %107 = vdwg.mxu0
    %v108 = vstv %s25
    %v109 = vadd.f32 %v100, %v108
    %v110 = vadd.f32 %v105, %v108
    %vm111 = vcmask 7168
    %v112 = vsel %vm111, %v109, -inf
    %v113 = vrot.slane %v112, 4
    %v114 = vmax.f32 %v112, %v113
    %v115 = vrot.slane %v114, 2
    %v116 = vmax.f32 %v114, %v115
    %v117 = vrot.slane %v116, 1
    %v118 = vmax.f32 %v116, %v117
    %v119 = vsel %vm111, %v110, -inf
    %v120 = vrot.slane %v119, 4
    %v121 = vmax.f32 %v119, %v120
    %v122 = vrot.slane %v121, 2
    %v123 = vmax.f32 %v121, %v122
    %v124 = vrot.slane %v123, 1
    %v125 = vmax.f32 %v123, %v124
    %v126 = vsub.f32 %v109, %v118
    %v127 = vsub.f32 %v110, %v125
    %v128 = vmul.f32 %v126, 1.442695
    %v129 = vpow.pop %v128
    %v130 = vmul.f32 %v127, 1.442695
    %v131 = vpow.pop %v130
    %v132 = vsel %vm111, %v129, 0.0
    %v133 = vrot.slane %v132, 4
    %v134 = vadd.f32 %v132, %v133
    %v135 = vrot.slane %v134, 2
    %v136 = vadd.f32 %v134, %v135
    %v137 = vrot.slane %v136, 1
    %v138 = vadd.f32 %v136, %v137
    %v139 = vsel %vm111, %v131, 0.0
    %v140 = vrot.slane %v139, 4
    %v141 = vadd.f32 %v139, %v140
    %v142 = vrot.slane %v141, 2
    %v143 = vadd.f32 %v141, %v142
    %v144 = vrot.slane %v143, 1
    %v145 = vadd.f32 %v143, %v144
    %v146 = vrcp.pop %v138
    %v147 = vrcp.pop %v145
    %v148 = vmul.f32 %v129, %v146
    %v149 = vmul.f32 %v131, %v147
    %151 = vset.pattern.permute.xlu0 0
    %152 = vperm.xlu0 %151, %v148
    %v153 = vpop.permute.xlu0 %152
    %156 = vset.pattern.permute.xlu0 0
    %157 = vperm.xlu0 %156, %v149
    %v158 = vpop.permute.xlu0 %157
    %v160 = vmul.f32 %v153, %v19
    %v161 = vmul.f32 %v158, %v20
    %v162 = vsel %vm26, %v160, 0.0
    %v163 = vrot.slane %v162, 4
    %v164 = vadd.f32 %v162, %v163
    %v165 = vrot.slane %v164, 2
    %v166 = vadd.f32 %v164, %v165
    %v167 = vrot.slane %v166, 1
    %v168 = vadd.f32 %v166, %v167
    %v169 = vsel %vm26, %v161, 0.0
    %v170 = vrot.slane %v169, 4
    %v171 = vadd.f32 %v169, %v170
    %v172 = vrot.slane %v171, 2
    %v173 = vadd.f32 %v171, %v172
    %v174 = vrot.slane %v173, 1
    %v175 = vadd.f32 %v173, %v174
    %vm178 = vcmask 1041409
    %v179 = vsel %vm178, %v175, %v168
    %vm181 = vcmask 254976
    %182 = vst.msk [vmem:[#allocation3] sm:$0x3] %vm181, %v179
    %v183 = vlaneseq
    %v184 = vand.u32 %v183, 127
    %v185 = vlaneseq
    %v186 = vshrl.u32 %v185, 7
    %v187 = vsub.s32 %v184, %v186
    %v188 = vrot.slane %v153, %v187
    %v189 = vlaneseq
    %v190 = vshrl.u32 %v189, 7
    %v191 = vsub.s32 %v184, %v190
    %v192 = vrot.slane %v158, %v191
    %v193 = vsel %vm178, %v192, %v188
    %vm195 = vcmask 58368
    %196 = vst.msk [vmem:[#allocation5] sm:$0x3] %vm195, %v193
    // Predicated region
    $region14: #{tpu_custom_call.1} parent=1 // pred_check
      _
    $region15: #{tpu_custom_call.1} parent=1 // pred_check_branch
      %198 = sbr.rel (0) target = $region17
    $region16: #{tpu_custom_call.1} parent=1 // pred_region
      %s200 = ssub.s32 32, 32
      %201 = vsyncadd [#allocation4], %s200
      %s203 = sshll.u32 [#allocation3], 4
      %s204 = int_to_ptr.vmem [resolvable:$true] %s203
      %206 = dma.vmem_to_hbm [thread:$0]  %s204, 32, %s3, [#allocation4]
    $region17: #{tpu_custom_call.1} parent=1 // pred_fallthru
      _
    // Predicated region
    $region18: #{tpu_custom_call.1} parent=1 // pred_check
      _
    $region19: #{tpu_custom_call.1} parent=1 // pred_check_branch
      %208 = sbr.rel (0) target = $region21
    $region20: #{tpu_custom_call.1} parent=1 // pred_region
      %s210 = ssub.s32 32, 32
      %211 = vsyncadd [#allocation6], %s210
      %s213 = sshll.u32 [#allocation5], 4
      %s214 = int_to_ptr.vmem [resolvable:$true] %s213
      %216 = dma.vmem_to_hbm [thread:$0]  %s214, 32, %s4, [#allocation6]
    $region21: #{tpu_custom_call.1} parent=1 // pred_fallthru
      _
    // Predicated region
    $region22: #{tpu_custom_call.1} parent=1 // pred_check
      _
    $region23: #{tpu_custom_call.1} parent=1 // pred_check_branch
      %218 = sbr.rel (0) target = $region25
    $region24: #{tpu_custom_call.1} parent=1 // pred_region
      %219 = dma.done [#allocation4], 32
    $region25: #{tpu_custom_call.1} parent=1 // pred_fallthru
      _
    // Predicated region
    $region26: #{tpu_custom_call.1} parent=1 // pred_check
      _
    $region27: #{tpu_custom_call.1} parent=1 // pred_check_branch
      %221 = sbr.rel (0) target = $region29
    $region28: #{tpu_custom_call.1} parent=1 // pred_region
      %222 = dma.done [#allocation6], 32
    $region29: #{tpu_custom_call.1} parent=1 // pred_fallthru
      _
    %223 = vsyncpa [#allocation4], 1
    %224 = vsyncpa [#allocation6], 1

</llo_original>
